<compile_context>
chip_gen: v6e
topology: v6e:2x2x1
jax: 0.10.0
libtpu: 0.0.40
codegen_flags: <defaults>
</compile_context>

<pallas_src>
import functools

import jax
import jax.numpy as jnp
from jax import lax
from jax.experimental import pallas as pl
from jax.experimental.pallas import tpu as pltpu

_GB_CH = 34     # "gb" channels: lanes [0, 34)
_N_CH = 68      # channels consumed by the loss: gb + rb = lanes [0, 68)
_C4 = 10.0


def _chip_defaults():
    """(n_tensorcores, default_block_rows, vmem_limit_bytes) per generation."""
    kind = ""
    try:
        kind = jax.devices()[0].device_kind.lower()
    except Exception:  # pragma: no cover - defensive; fall through to default
        pass
    if "v7" in kind:                      # v7x: 2 TC/chip, 64 MiB VMEM per TC
        return 2, 8192, 40 * 1024 * 1024
    if "v4" in kind or "v5p" in kind:     # megacore chips, 128 MiB VMEM
        return 2, 16384, 80 * 1024 * 1024
    if "v5" in kind or "v6" in kind:      # v5e / v6e: 1 TC, 128 MiB VMEM
        return 1, 16384, 80 * 1024 * 1024
    return 1, 8192, 48 * 1024 * 1024      # unknown: conservative


def _custom_loss_kernel(o_ref, t_ref, out_ref, *, n_rows, block_rows, n_r):
    """One grid step over rows [start, start + block_rows) of the (N, F) slabs.

    o_ref, t_ref : VMEM (block_rows, F) native dtype   outputs / targets tile
    out_ref      : VMEM (1, F) f32                     per-core lane-wise sums
                   (index_map constant across r => resident accumulator)
    """
    c = pl.program_id(0)          # core-split index ("parallel")
    r = pl.program_id(1)          # row-block index ("arbitrary" reduction axis)

    @pl.when(r == 0)
    def _init():
        out_ref[...] = jnp.zeros_like(out_ref)

    # Cast AFTER the load: HBM traffic stays at the native dtype width.
    o = o_ref[...].astype(jnp.float32)
    t = t_ref[...].astype(jnp.float32)

    n_lanes = o.shape[-1]
    lane = lax.broadcasted_iota(jnp.int32, (1, n_lanes), 1)
    is_gb = lane < _GB_CH                                    # lanes [0, 34)
    is_rb = jnp.logical_and(lane >= _GB_CH, lane < _N_CH)    # lanes [34, 68)

    # gb lanes:  a = t,     b = o       ->  d = sqrt(a) - sqrt(b)
    # rb lanes:  a = 1 - t, b = 1 - o
    wt = jnp.where(is_gb, t, 1.0 - t)
    wo = jnp.where(is_gb, o, 1.0 - o)
    # Even-power identity: d^2 = a + b - 2*sqrt(a*b)  (single EUP sqrt).
    d2 = jnp.maximum(wt + wo - 2.0 * jnp.sqrt(wt * wo), 0.0)
    # gb lanes: d^2 + 10*d^4 ; rb lanes: d^2 ; lanes >= 68 (if any): 0.
    contrib = jnp.where(is_gb, d2 + _C4 * (d2 * d2),
                        jnp.where(is_rb, d2, 0.0))

    start = (c * n_r + r) * block_rows         # logical first row of this tile
    is_full = start + block_rows <= n_rows

    @pl.when(is_full)
    def _acc_full():
        out_ref[...] += jnp.sum(contrib, axis=0, keepdims=True)

    @pl.when(jnp.logical_not(is_full))
    def _acc_masked():
        # Partial (or fully out-of-range clamped) tail tile: select away the
        # invalid rows (select, not multiply — garbage rows may hold NaN).
        row = start + lax.broadcasted_iota(jnp.int32, (block_rows, 1), 0)
        valid = row < n_rows
        out_ref[...] += jnp.sum(jnp.where(valid, contrib, 0.0),
                                axis=0, keepdims=True)


def _round_up(x, m):
    return (x + m - 1) // m * m


@functools.partial(jax.jit, static_argnames=("block_rows",))
def custom_loss(outputs: jax.Array, targets: jax.Array, *,
                block_rows: int | None = None) -> jax.Array:
    """Pallas implementation of CustomLoss.forward(outputs, targets)."""
    assert outputs.shape == targets.shape
    B, T, F = outputs.shape
    assert F >= _N_CH, "CustomLoss expects at least 68 features"

    n_tc, default_block_rows, vmem_limit = _chip_defaults()

    # Keep the native dtype and the full feature axis (lanes >= 68 are masked
    # in-kernel) — no wrapper astype / slice copies hitting HBM.
    if F > 128:
        # Rare path: a >128-lane feature axis; slice to the 68 used channels
        # (this does materialize a copy, but keeps the kernel lane budget sane).
        outputs = outputs[..., :_N_CH]
        targets = targets[..., :_N_CH]
        F = _N_CH

    N = B * T
    o2 = outputs.reshape(N, F)     # contiguous reshape, no copy
    t2 = targets.reshape(N, F)

    # Row-tile size: multiple of 32 (covers f32/bf16/int8 sublane packing),
    # capped so 2 inputs x 2 pipeline buffers (lane-padded to 128) fit VMEM.
    if block_rows is None:
        block_rows = default_block_rows
    block_rows = max(32, _round_up(min(block_rows, 32768), 32))
    if N <= block_rows:
        block_rows = N                 # single full-extent block (always legal)

    total_blocks = (N + block_rows - 1) // block_rows
    n_split = n_tc if total_blocks >= n_tc else 1      # megacore split only
    n_r = (total_blocks + n_split - 1) // n_split
    last_block = total_blocks - 1

    def row_map(c, r):
        # Clamp: an (optional) out-of-range trailing block on core 1 just
        # re-fetches the last real block; its rows are masked in the kernel.
        return (jnp.minimum(c * n_r + r, last_block), 0)

    in_spec = pl.BlockSpec((block_rows, F), row_map)

    kernel = functools.partial(_custom_loss_kernel, n_rows=N,
                               block_rows=block_rows, n_r=n_r)

    itemsize = jnp.dtype(outputs.dtype).itemsize
    cost = pl.CostEstimate(
        flops=10 * N * F,
        transcendentals=N * F,                      # one sqrt per element
        bytes_accessed=2 * N * F * itemsize + n_split * F * 4,
    )

    # NOTE: on v7x the leading ("parallel") axis is expected to shard across
    # the two TensorCores; if profiling shows both c values on one TC, switch
    # that axis to pltpu.CORE_PARALLEL.
    partials = pl.pallas_call(
        kernel,
        out_shape=jax.ShapeDtypeStruct((n_split, F), jnp.float32),
        grid=(n_split, n_r),
        in_specs=[in_spec, in_spec],
        out_specs=pl.BlockSpec((1, F), lambda c, r: (c, 0)),
        compiler_params=pltpu.CompilerParams(
            dimension_semantics=("parallel", "arbitrary"),
            vmem_limit_bytes=vmem_limit),
        cost_estimate=cost,
    )(o2, t2)

    # Tiny epilogue: collapse per-core lane-wise partial sums and apply the
    # single 1/n scaling (all three means share divisor B*T*34).
    inv_n = 1.0 / float(N * _GB_CH)
    return jnp.sum(partials) * jnp.float32(inv_n)


def _custom_loss_ref(outputs, targets):
    """Pure-JAX reference (mirrors the PyTorch forward)."""
    gamma = 0.5
    C4 = 10.0
    gb_hat = outputs[:, :, :34]
    rb_hat = outputs[:, :, 34:68]
    gb = targets[:, :, :34]
    rb = targets[:, :, 34:68]
    d1 = jnp.power(gb, gamma) - jnp.power(gb_hat, gamma)
    d2 = jnp.power(1.0 - rb, gamma) - jnp.power(1.0 - rb_hat, gamma)
    return jnp.mean(d1 ** 2) + C4 * jnp.mean(d1 ** 4) + jnp.mean(d2 ** 2)


if __name__ == "__main__":
    key = jax.random.PRNGKey(0)
    k1, k2, k3, k4 = jax.random.split(key, 4)

    # Small shape matching the module: (batch, seq, features=68).
    B, T, F = 2, 8, 68
    outputs = jax.random.uniform(k1, (B, T, F), dtype=jnp.float32)
    targets = jax.random.uniform(k2, (B, T, F), dtype=jnp.float32)
    loss = custom_loss(outputs, targets)
    jax.block_until_ready(loss)
    ref = _custom_loss_ref(outputs, targets)
    assert jnp.allclose(loss, ref, rtol=1e-4, atol=1e-5), (loss, ref)

    # Second case: exercises the multi-block grid, the (possible) core split
    # and the partial-tail masking (N = 1500 rows, 128-row tiles, partial tail).
    B2, T2 = 3, 500
    outputs2 = jax.random.uniform(k3, (B2, T2, F), dtype=jnp.float32)
    targets2 = jax.random.uniform(k4, (B2, T2, F), dtype=jnp.float32)
    loss2 = custom_loss(outputs2, targets2, block_rows=128)
    jax.block_until_ready(loss2)
    ref2 = _custom_loss_ref(outputs2, targets2)
    assert jnp.allclose(loss2, ref2, rtol=1e-4, atol=1e-5), (loss2, ref2)

    print("KERNEL_OK")
</pallas_src>

<mosaic_0001>
module attributes {stable_mosaic.version = 11 : i64} {
  func.func @_custom_loss_kernel(%arg0: i32, %arg1: i32, %arg2: memref<16x68xf32, #tpu.memory_space<vmem>>, %arg3: memref<16x68xf32, #tpu.memory_space<vmem>>, %arg4: memref<1x68xf32, #tpu.memory_space<vmem>>) attributes {dimension_semantics = [#tpu.dimension_semantics<parallel>, #tpu.dimension_semantics<arbitrary>], iteration_bounds = array<i64: 1, 1>, scalar_prefetch = 0 : i64, scratch_operands = 0 : i64, tpu.core_type = #tpu.core_type<tc>, window_params = [{transform_indices = @transform_0, window_bounds = array<i64: 16, 68>}, {transform_indices = @transform_1, window_bounds = array<i64: 16, 68>}, {transform_indices = @transform_2, window_bounds = array<i64: 1, 68>}]} {
    %c0_i32 = arith.constant 0 : i32
    %0 = arith.cmpi eq, %arg1, %c0_i32 : i32
    %1 = arith.extui %0 : i1 to i32
    %c0_i32_0 = arith.constant 0 : i32
    %2 = arith.cmpi ne, %1, %c0_i32_0 : i32
    scf.if %2 {
      %cst_14 = arith.constant 0.000000e+00 : f32
      %52 = vector.broadcast %cst_14 : f32 to vector<1x68xf32>
      %c0_15 = arith.constant 0 : index
      %c0_16 = arith.constant 0 : index
      %53 = vector.load %arg4[%c0_15, %c0_16] : memref<1x68xf32, #tpu.memory_space<vmem>>, vector<1x68xf32>
      tpu.vector_store %arg4[%c0_15, %c0_16], %52 {strides = array<i32>} : memref<1x68xf32, #tpu.memory_space<vmem>>, vector<1x68xf32>,
    } else {
    }
    %c0 = arith.constant 0 : index
    %c0_1 = arith.constant 0 : index
    %3 = vector.load %arg2[%c0, %c0_1] : memref<16x68xf32, #tpu.memory_space<vmem>>, vector<16x68xf32>
    %c0_2 = arith.constant 0 : index
    %c0_3 = arith.constant 0 : index
    %4 = vector.load %arg3[%c0_2, %c0_3] : memref<16x68xf32, #tpu.memory_space<vmem>>, vector<16x68xf32>
    %5 = tpu.iota {dimensions = array<i32: 1>} : vector<1x68xi32>
    %c34_i32 = arith.constant 34 : i32
    %6 = vector.broadcast %c34_i32 : i32 to vector<1x68xi32>
    %7 = arith.cmpi slt, %5, %6 : vector<1x68xi32>
    %c34_i32_4 = arith.constant 34 : i32
    %8 = vector.broadcast %c34_i32_4 : i32 to vector<1x68xi32>
    %9 = arith.cmpi sge, %5, %8 : vector<1x68xi32>
    %c68_i32 = arith.constant 68 : i32
    %10 = vector.broadcast %c68_i32 : i32 to vector<1x68xi32>
    %11 = arith.cmpi slt, %5, %10 : vector<1x68xi32>
    %12 = arith.andi %9, %11 : vector<1x68xi1>
    %cst = arith.constant 1.000000e+00 : f32
    %13 = vector.broadcast %cst : f32 to vector<16x68xf32>
    %14 = arith.subf %13, %4 : vector<16x68xf32>
    %15 = vector.shape_cast %7 : vector<1x68xi1> to vector<1x68xi1>
    %16 = vector.broadcast %15 : vector<1x68xi1> to vector<16x68xi1>
    %17 = arith.select %16, %4, %14 : vector<16x68xi1>, vector<16x68xf32>
    %cst_5 = arith.constant 1.000000e+00 : f32
    %18 = vector.broadcast %cst_5 : f32 to vector<16x68xf32>
    %19 = arith.subf %18, %3 : vector<16x68xf32>
    %20 = vector.shape_cast %7 : vector<1x68xi1> to vector<1x68xi1>
    %21 = vector.broadcast %20 : vector<1x68xi1> to vector<16x68xi1>
    %22 = arith.select %21, %3, %19 : vector<16x68xi1>, vector<16x68xf32>
    %23 = arith.addf %17, %22 : vector<16x68xf32>
    %24 = arith.mulf %17, %22 : vector<16x68xf32>
    %25 = math.sqrt %24 : vector<16x68xf32>
    %cst_6 = arith.constant 2.000000e+00 : f32
    %26 = vector.broadcast %cst_6 : f32 to vector<16x68xf32>
    %27 = arith.mulf %26, %25 : vector<16x68xf32>
    %28 = arith.subf %23, %27 : vector<16x68xf32>
    %cst_7 = arith.constant 0.000000e+00 : f32
    %29 = vector.broadcast %cst_7 : f32 to vector<16x68xf32>
    %30 = arith.maximumf %28, %29 : vector<16x68xf32>
    %31 = arith.mulf %30, %30 : vector<16x68xf32>
    %cst_8 = arith.constant 1.000000e+01 : f32
    %32 = vector.broadcast %cst_8 : f32 to vector<16x68xf32>
    %33 = arith.mulf %32, %31 : vector<16x68xf32>
    %34 = arith.addf %30, %33 : vector<16x68xf32>
    %cst_9 = arith.constant 0.000000e+00 : f32
    %35 = vector.shape_cast %12 : vector<1x68xi1> to vector<1x68xi1>
    %36 = vector.broadcast %35 : vector<1x68xi1> to vector<16x68xi1>
    %37 = vector.broadcast %cst_9 : f32 to vector<16x68xf32>
    %38 = arith.select %36, %30, %37 : vector<16x68xi1>, vector<16x68xf32>
    %39 = vector.shape_cast %7 : vector<1x68xi1> to vector<1x68xi1>
    %40 = vector.broadcast %39 : vector<1x68xi1> to vector<16x68xi1>
    %41 = arith.select %40, %34, %38 : vector<16x68xi1>, vector<16x68xf32>
    %c1_i32 = arith.constant 1 : i32
    %42 = arith.muli %arg0, %c1_i32 : i32
    %43 = arith.addi %42, %arg1 : i32
    %c16_i32 = arith.constant 16 : i32
    %44 = arith.muli %43, %c16_i32 : i32
    %c16_i32_10 = arith.constant 16 : i32
    %45 = arith.addi %44, %c16_i32_10 : i32
    %c16_i32_11 = arith.constant 16 : i32
    %46 = arith.cmpi sle, %45, %c16_i32_11 : i32
    %47 = arith.extui %46 : i1 to i32
    %c0_i32_12 = arith.constant 0 : i32
    %48 = arith.cmpi ne, %47, %c0_i32_12 : i32
    scf.if %48 {
      %c0_14 = arith.constant 0 : index
      %c0_15 = arith.constant 0 : index
      %52 = vector.load %arg4[%c0_14, %c0_15] : memref<1x68xf32, #tpu.memory_space<vmem>>, vector<1x68xf32>
      %cst_16 = arith.constant dense<0.000000e+00> : vector<68xf32>
      %53 = vector.multi_reduction <add>, %41, %cst_16 [0] : vector<16x68xf32> to vector<68xf32>
      %54 = vector.shape_cast %53 : vector<68xf32> to vector<1x68xf32>
      %55 = arith.addf %52, %54 : vector<1x68xf32>
      %c0_17 = arith.constant 0 : index
      %c0_18 = arith.constant 0 : index
      %56 = vector.load %arg4[%c0_17, %c0_18] : memref<1x68xf32, #tpu.memory_space<vmem>>, vector<1x68xf32>
      tpu.vector_store %arg4[%c0_17, %c0_18], %55 {strides = array<i32>} : memref<1x68xf32, #tpu.memory_space<vmem>>, vector<1x68xf32>,
    } else {
    }
    %true = arith.constant true
    %49 = arith.xori %46, %true : i1
    %50 = arith.extui %49 : i1 to i32
    %c0_i32_13 = arith.constant 0 : i32
    %51 = arith.cmpi ne, %50, %c0_i32_13 : i32
    scf.if %51 {
      %52 = tpu.iota {dimensions = array<i32: 0>} : vector<16x1xi32>
      %53 = vector.broadcast %44 : i32 to vector<16x1xi32>
      %54 = arith.addi %53, %52 : vector<16x1xi32>
      %c16_i32_14 = arith.constant 16 : i32
      %55 = vector.broadcast %c16_i32_14 : i32 to vector<16x1xi32>
      %56 = arith.cmpi slt, %54, %55 : vector<16x1xi32>
      %c0_15 = arith.constant 0 : index
      %c0_16 = arith.constant 0 : index
      %57 = vector.load %arg4[%c0_15, %c0_16] : memref<1x68xf32, #tpu.memory_space<vmem>>, vector<1x68xf32>
      %cst_17 = arith.constant 0.000000e+00 : f32
      %58 = vector.shape_cast %56 : vector<16x1xi1> to vector<16x1xi1>
      %59 = vector.broadcast %58 : vector<16x1xi1> to vector<16x68xi1>
      %60 = vector.broadcast %cst_17 : f32 to vector<16x68xf32>
      %61 = arith.select %59, %41, %60 : vector<16x68xi1>, vector<16x68xf32>
      %cst_18 = arith.constant dense<0.000000e+00> : vector<68xf32>
      %62 = vector.multi_reduction <add>, %61, %cst_18 [0] : vector<16x68xf32> to vector<68xf32>
      %63 = vector.shape_cast %62 : vector<68xf32> to vector<1x68xf32>
      %64 = arith.addf %57, %63 : vector<1x68xf32>
      %c0_19 = arith.constant 0 : index
      %c0_20 = arith.constant 0 : index
      %65 = vector.load %arg4[%c0_19, %c0_20] : memref<1x68xf32, #tpu.memory_space<vmem>>, vector<1x68xf32>
      tpu.vector_store %arg4[%c0_19, %c0_20], %64 {strides = array<i32>} : memref<1x68xf32, #tpu.memory_space<vmem>>, vector<1x68xf32>,
    } else {
    }
    return
  }
  func.func @transform_0(%arg0: i32, %arg1: i32) -> (i32, i32) {
    %c1_i32 = arith.constant 1 : i32
    %0 = arith.muli %arg0, %c1_i32 : i32
    %1 = arith.addi %0, %arg1 : i32
    %c0_i32 = arith.constant 0 : i32
    %2 = arith.minsi %1, %c0_i32 : i32
    %c0_i32_0 = arith.constant 0 : i32
    %c0_i32_1 = arith.constant 0 : i32
    return %2, %c0_i32_0 : i32, i32
  }
  func.func @transform_1(%arg0: i32, %arg1: i32) -> (i32, i32) {
    %c1_i32 = arith.constant 1 : i32
    %0 = arith.muli %arg0, %c1_i32 : i32
    %1 = arith.addi %0, %arg1 : i32
    %c0_i32 = arith.constant 0 : i32
    %2 = arith.minsi %1, %c0_i32 : i32
    %c0_i32_0 = arith.constant 0 : i32
    %c0_i32_1 = arith.constant 0 : i32
    return %2, %c0_i32_0 : i32, i32
  }
  func.func @transform_2(%arg0: i32, %arg1: i32) -> (i32, i32) {
    %c0_i32 = arith.constant 0 : i32
    %c0_i32_0 = arith.constant 0 : i32
    return %arg0, %c0_i32 : i32, i32
  }
}

</mosaic_0001>

<llo_original>
// kernel: custom_loss.1
$region0: #{custom_loss.1}
  #allocation0 [shape = 'u32[]', space=smem, size = 0x4, offset = 0x4, fixed_abs, tag = 'smem constant byte address 0x4 - core index']
  #allocation1 [shape = 'u32[144,128]{1,0:T(1,128)}', space=vmem, size = 0x12000, scoped, tag = 'internal scratch']
  %s0 = inlined_call_operand.hbm [shape: f32[16,68], index: 0, kind: input, shape index: {}]
  %s1 = inlined_call_operand.hbm [shape: f32[16,68], index: 1, kind: input, shape index: {}]
  %s2 = inlined_call_operand.vmem [shape: f32[1,68], index: 2, kind: output, shape index: {}]
  %s3 = sld [smem:[#allocation0]]
  $region38: #{custom_loss.1} parent=0
    _
  %s5 = ssub.s32 1, %s3
  %s6 = scalar_select 0, %s5, %s3
  $region1: #{custom_loss.1} parent=0
    #allocation2 [shape = 'u8[8192]{0}', space=vmem, size = 0x2000, scoped, tag = 'input window, operand 0, single buffered']
    #allocation3 [shape = 's32[1]{0}', space=sflag, size = 0x4, scoped, tag = 'scoped memory for custom_loss.1']
    #allocation4 [shape = 'u8[8192]{0}', space=vmem, size = 0x2000, scoped, tag = 'input window, operand 1, single buffered']
    #allocation5 [shape = 's32[1]{0}', space=sflag, size = 0x4, scoped, tag = 'scoped memory for custom_loss.1']
    %7 = vsyncpa [#allocation3], 0
    %8 = vsyncpa [#allocation5], 0
    // Predicated region
    $region2: #{custom_loss.1} parent=1 // pred_check
      _
    $region3: #{custom_loss.1} parent=1 // pred_check_branch
      %10 = sbr.rel (0) target = $region5
    $region4: #{custom_loss.1} parent=1 // pred_region
      %s11 = sadd.s32 0, 0
      %p12 = scmp.lt.s32.totalorder %s11, 0
      %s13 = scalar_select %p12, %s11, 0
      %s14 = smul.u32 2, %s13
      %s16 = ssub.s32 256, 256
      %17 = vsyncadd [#allocation3], %s16
      %s18 = smul.addr %s14, 128
      %s19 = scalar_lea.hbm %s0, %s18
      %s20 = sshll.u32 [#allocation2], 4
      %s21 = int_to_ptr.vmem [resolvable:$true] %s20
      %26 = dma.hbm_to_vmem [thread:$0]  %s19, 256, %s21, [#allocation3], 128, 128, 8
    $region5: #{custom_loss.1} parent=1 // pred_fallthru
      _
    // Predicated region
    $region6: #{custom_loss.1} parent=1 // pred_check
      _
    $region7: #{custom_loss.1} parent=1 // pred_check_branch
      %28 = sbr.rel (0) target = $region9
    $region8: #{custom_loss.1} parent=1 // pred_region
      %s29 = sadd.s32 0, 0
      %p30 = scmp.lt.s32.totalorder %s29, 0
      %s31 = scalar_select %p30, %s29, 0
      %s32 = smul.u32 2, %s31
      %s34 = ssub.s32 256, 256
      %35 = vsyncadd [#allocation5], %s34
      %s36 = smul.addr %s32, 128
      %s37 = scalar_lea.hbm %s1, %s36
      %s38 = sshll.u32 [#allocation4], 4
      %s39 = int_to_ptr.vmem [resolvable:$true] %s38
      %44 = dma.hbm_to_vmem [thread:$0]  %s37, 256, %s39, [#allocation5], 128, 128, 8
    $region9: #{custom_loss.1} parent=1 // pred_fallthru
      _
    // Predicated region
    $region10: #{custom_loss.1} parent=1 // pred_check
      _
    $region11: #{custom_loss.1} parent=1 // pred_check_branch
      %46 = sbr.rel (0) target = $region13
    $region12: #{custom_loss.1} parent=1 // pred_region
      %47 = dma.done [#allocation3], 256
    $region13: #{custom_loss.1} parent=1 // pred_fallthru
      _
    // Predicated region
    $region14: #{custom_loss.1} parent=1 // pred_check
      _
    $region15: #{custom_loss.1} parent=1 // pred_check_branch
      %49 = sbr.rel (0) target = $region17
    $region16: #{custom_loss.1} parent=1 // pred_region
      %50 = dma.done [#allocation5], 256
    $region17: #{custom_loss.1} parent=1 // pred_fallthru
      _
    %s51 = sadd.s32 0, 0
    %p52 = scmp.lt.s32.totalorder %s51, 0
    %s53 = scalar_select %p52, %s51, 0
    %s54 = smul.u32 2, %s53
    %s55 = sadd.s32 0, 0
    %p56 = scmp.lt.s32.totalorder %s55, 0
    %s57 = scalar_select %p56, %s55, 0
    %s58 = smul.u32 2, %s57
    %p59 = scmp.eq.s32.totalorder 0, 0
    // Predicated region
    $region18: #{custom_loss.1} parent=1 // pred_check
      %p60 = pneg %p59
    $region19: #{custom_loss.1} parent=1 // pred_check_branch
      %62 = sbr.rel (%p60) target = $region21
    $region20: #{custom_loss.1} parent=1 // pred_region
      %vm63 = vcmask 548864
      %64 = vst.msk [vmem:[%s2] sm:$0x1] %vm63, 0.0
    $region21: #{custom_loss.1} parent=1 // pred_fallthru
      _
    %v65 = vld [vmem:[#allocation2] sm:$0xff]
    %v66 = vld [vmem:[#allocation2 + $0x8] sm:$0xff]
    %v67 = vld [vmem:[#allocation4] sm:$0xff]
    %v68 = vld [vmem:[#allocation4 + $0x8] sm:$0xff]
    %v69 = vlaneseq
    %v70 = vand.u32 %v69, 127
    %vm71 = vcmp.lt.s32.totalorder %v70, 34
    %vm72 = vcmp.ge.s32.totalorder %v70, 34
    %vm73 = vcmp.lt.s32.totalorder %v70, 68
    %vm74 = vmand %vm72, %vm73
    %v75 = vsub.f32 1.0, %v67
    %v76 = vsub.f32 1.0, %v68
    %v77 = vsel %vm71, 1, 0
    %vm78 = vcmp.eq.s32.totalorder %v77, 1
    %v79 = vsel %vm78, %v67, %v75
    %v80 = vsel %vm78, %v68, %v76
    %v81 = vsub.f32 1.0, %v65
    %v82 = vsub.f32 1.0, %v66
    %v83 = vsel %vm78, %v65, %v81
    %v84 = vsel %vm78, %v66, %v82
    %v85 = vadd.f32 %v79, %v83
    %v86 = vadd.f32 %v80, %v84
    %v87 = vmul.f32 %v79, %v83
    %v88 = vmul.f32 %v80, %v84
    %v89 = vrsqrt.pop %v87
    %v90 = vmul.f32 %v87, %v89
    %vm91 = vcmp.eq.f32.partialorder %v87, inf
    %v92 = vsel %vm91, %v87, %v90
    %vm93 = vcmp.eq.f32.partialorder %v87, 0.0
    %v94 = vand.u32 %v87, 2147483648
    %v95 = vsel %vm93, %v94, %v92
    %v96 = vrsqrt.pop %v88
    %v97 = vmul.f32 %v88, %v96
    %vm98 = vcmp.eq.f32.partialorder %v88, inf
    %v99 = vsel %vm98, %v88, %v97
    %vm100 = vcmp.eq.f32.partialorder %v88, 0.0
    %v101 = vand.u32 %v88, 2147483648
    %v102 = vsel %vm100, %v101, %v99
    %v103 = vmul.f32 %v95, 2.0
    %v104 = vmul.f32 %v102, 2.0
    %v105 = vsub.f32 %v85, %v103
    %v106 = vsub.f32 %v86, %v104
    %v107 = vmax.f32 %v105, 0.0
    %v108 = vmax.f32 %v106, 0.0
    %v109 = vmul.f32 %v107, %v107
    %v110 = vmul.f32 %v108, %v108
    %v111 = vmul.f32 %v109, 10.0
    %v112 = vmul.f32 %v110, 10.0
    %v113 = vadd.f32 %v107, %v111
    %v114 = vadd.f32 %v108, %v112
    %v115 = vsel %vm74, 1, 0
    %vm116 = vcmp.eq.s32.totalorder %v115, 1
    %v117 = vsel %vm116, %v107, 0.0
    %v118 = vsel %vm116, %v108, 0.0
    %v119 = vsel %vm78, %v113, %v117
    %v120 = vsel %vm78, %v114, %v118
    %s121 = sadd.s32 0, 0
    %s122 = smul.u32 %s121, 16
    %s123 = sadd.s32 %s122, 16
    %p124 = scmp.le.s32.totalorder %s123, 16
    // Predicated region
    $region22: #{custom_loss.1} parent=1 // pred_check
      %p125 = pneg %p124
    $region23: #{custom_loss.1} parent=1 // pred_check_branch
      %127 = sbr.rel (%p125) target = $region25
    $region24: #{custom_loss.1} parent=1 // pred_region
      %v128 = vld [vmem:[%s2] sm:$0x1]
      %vm129 = vcmask 556032
      %v130 = vsel %vm129, %v119, 0.0
      %v131 = vsel %vm129, %v120, 0.0
      %v132 = vadd.f32 %v130, %v131
      %v133 = vrot.slane %v132, 4
      %v134 = vadd.f32 %v132, %v133
      %v135 = vrot.slane %v134, 2
      %v136 = vadd.f32 %v134, %v135
      %v137 = vrot.slane %v136, 1
      %v138 = vadd.f32 %v136, %v137
      %v139 = vadd.f32 %v128, %v138
      %vm140 = vcmask 548864
      %141 = vst.msk [vmem:[%s2] sm:$0x1] %vm140, %v139
    $region25: #{custom_loss.1} parent=1 // pred_fallthru
      _
    %p142 = scmp.gt.s32.totalorder %s123, 16
    // Predicated region
    $region26: #{custom_loss.1} parent=1 // pred_check
      %p143 = pneg %p142
    $region27: #{custom_loss.1} parent=1 // pred_check_branch
      %145 = sbr.rel (%p143) target = $region29
    $region28: #{custom_loss.1} parent=1 // pred_region
      %v146 = vlaneseq
      %v147 = vshrl.u32 %v146, 7
      %v148 = vadd.s32 %v147, 8
      %v149 = vstv %s122
      %v150 = vadd.s32 %v149, %v147
      %v151 = vadd.s32 %v149, %v148
      %vm152 = vcmp.lt.s32.totalorder %v150, 16
      %vm153 = vcmp.lt.s32.totalorder %v151, 16
      %v154 = vld [vmem:[%s2] sm:$0x1]
      %v155 = vsel %vm152, 1, 0
      %v156 = vsel %vm153, 1, 0
      %vm157 = vcmp.eq.s32.totalorder %v155, 1
      %vm158 = vcmp.eq.s32.totalorder %v156, 1
      %v159 = vsel %vm157, %v119, 0.0
      %v160 = vsel %vm158, %v120, 0.0
      %vm161 = vcmask 556032
      %v162 = vsel %vm161, %v159, 0.0
      %v163 = vsel %vm161, %v160, 0.0
      %v164 = vadd.f32 %v162, %v163
      %v165 = vrot.slane %v164, 4
      %v166 = vadd.f32 %v164, %v165
      %v167 = vrot.slane %v166, 2
      %v168 = vadd.f32 %v166, %v167
      %v169 = vrot.slane %v168, 1
      %v170 = vadd.f32 %v168, %v169
      %v171 = vadd.f32 %v154, %v170
      %vm172 = vcmask 548864
      %173 = vst.msk [vmem:[%s2] sm:$0x1] %vm172, %v171
    $region29: #{custom_loss.1} parent=1 // pred_fallthru
      _
    // Predicated region
    $region30: #{custom_loss.1} parent=1 // pred_check
      _
    $region31: #{custom_loss.1} parent=1 // pred_check_branch
      %175 = sbr.rel (0) target = $region33
    $region32: #{custom_loss.1} parent=1 // pred_region
      _
    $region33: #{custom_loss.1} parent=1 // pred_fallthru
      _
    // Predicated region
    $region34: #{custom_loss.1} parent=1 // pred_check
      _
    $region35: #{custom_loss.1} parent=1 // pred_check_branch
      %177 = sbr.rel (0) target = $region37
    $region36: #{custom_loss.1} parent=1 // pred_region
      _
    $region37: #{custom_loss.1} parent=1 // pred_fallthru
      _
    %178 = vsyncpa [#allocation3], 1
    %179 = vsyncpa [#allocation5], 1

</llo_original>
